<compile_context>
chip_gen: v7x
topology: tpu7x:2x2x1
jax: 0.10.0
libtpu: 0.0.40
codegen_flags: <defaults>
</compile_context>

<pallas_src>
import jax
import jax.numpy as jnp
from jax.experimental import pallas as pl
from jax.experimental.pallas import tpu as pltpu


_TV_CANDIDATES = (8192, 4096, 2048, 1024, 512, 256, 128)


def _round_up(x, m):
    return (x + m - 1) // m * m


# --------------------------------------------------------------------------
# Kernel
# --------------------------------------------------------------------------
def _gen_output_kernel(x_ref, wt_ref, b_ref, o_ref, m_ref, l_ref):
    """One (batch-tile, vocab-tile) grid step.

    x_ref : (TB, H)     bf16   resident across the vocab axis
    wt_ref: (H, TV)     bf16   streamed weight tile
    b_ref : (1, TV)     f32    streamed bias tile
    o_ref : (TB, V_pad) out    resident across vocab axis (raw logits until
                               the last vocab tile, probabilities after)
    m_ref : (TB, 1)     f32    running row max   (online softmax)
    l_ref : (TB, 1)     f32    running row sum of exp(logit - m)
    """
    j = pl.program_id(1)
    nj = pl.num_programs(1)
    tv = wt_ref.shape[1]

    @pl.when(j == 0)
    def _init():
        m_ref[...] = jnp.full_like(m_ref, -jnp.inf)
        l_ref[...] = jnp.zeros_like(l_ref)

    # MXU matmul (bf16 in, f32 accumulate) + bias for this vocab tile.
    tile = jnp.dot(x_ref[...], wt_ref[...], preferred_element_type=jnp.float32)
    tile = tile + b_ref[...]

    # Stash raw logits for this tile directly into the resident output block.
    col = pl.multiple_of(j * tv, tv)
    o_ref[:, pl.ds(col, tv)] = tile.astype(o_ref.dtype)

    # Online-softmax partial reductions over the (TB, TV) tile only — these
    # ride free VPU/XLU slots while the kernel is weight-DMA bound.
    m_old = m_ref[...]
    m_new = jnp.maximum(m_old, jnp.max(tile, axis=-1, keepdims=True))
    l_ref[...] = (l_ref[...] * jnp.exp(m_old - m_new)
                  + jnp.sum(jnp.exp(tile - m_new), axis=-1, keepdims=True))
    m_ref[...] = m_new

    # Finalize: a single chunked exp-and-scale pass over the assembled logits.
    @pl.when(j == nj - 1)
    def _finalize():
        m = m_ref[...]
        inv_l = 1.0 / l_ref[...]          # exact divide: rows sum to 1

        @pl.loop(0, nj)
        def _chunk(c):
            cc = pl.multiple_of(c * tv, tv)
            chunk = o_ref[:, pl.ds(cc, tv)].astype(jnp.float32)
            o_ref[:, pl.ds(cc, tv)] = (jnp.exp(chunk - m) * inv_l).astype(o_ref.dtype)


# --------------------------------------------------------------------------
# One-time (init) parameter folding — register_buffer semantics
# --------------------------------------------------------------------------
def prepare_gen_output_params(weight, bias, out_map=None, pad_multiple=2048):
    """Fold the out_map gather, transpose and vocab padding into the params.

    weight: [V, H] (PyTorch Linear layout), bias: [V], out_map: [V] int / None.
    Returns (wt, b, v_out): wt [H, V_pad] bf16, b [1, V_pad] f32, v_out = V.
    Padded columns have zero weights and -1e30 bias -> softmax to exactly 0.
    """
    weight = jnp.asarray(weight, jnp.float32)
    bias = jnp.asarray(bias, jnp.float32)
    if out_map is not None:
        weight = weight[out_map, :]
        bias = bias[out_map]
    v, h = weight.shape

    v128 = _round_up(v, 128)
    pad_to = 128
    while pad_to < pad_multiple and pad_to * 2 <= v128:
        pad_to *= 2
    v_pad = _round_up(v, pad_to)

    if v_pad != v:
        weight = jnp.concatenate(
            [weight, jnp.zeros((v_pad - v, h), jnp.float32)], axis=0)
        bias = jnp.concatenate(
            [bias, jnp.full((v_pad - v,), -1e30, jnp.float32)], axis=0)

    wt = weight.T.astype(jnp.bfloat16)      # [H, V_pad]
    b = bias.reshape(1, -1)                 # [1, V_pad] f32
    return wt, b, v


# --------------------------------------------------------------------------
# Tiling / VMEM budget helpers
# --------------------------------------------------------------------------
def _vmem_budget_and_limit():
    """Generation-aware VMEM budget (tile picking) and scoped limit."""
    try:
        cap = int(pltpu.get_tpu_info().vmem_capacity_bytes)
    except Exception:
        cap = 64 * 1024 * 1024              # conservative: v7x per-TC VMEM
    budget = max(int(cap * 0.70), 16 * 1024 * 1024)
    limit = max(int(cap * 0.85), budget)
    return budget, limit


def _batch_tile_candidates(b):
    """Returns (b_pad, candidate TB list, largest first)."""
    if b <= 128:
        cands = [b] + [t for t in (64, 32, 16, 8, 4, 2, 1) if t < b and b % t == 0]
        return b, cands
    cands = [t for t in (128, 64, 32, 16, 8, 4, 2, 1) if b % t == 0]
    if cands:
        return b, cands
    # Awkward batch: pad to a multiple of 128 (extra rows zeroed, sliced off).
    return _round_up(b, 128), [128, 64, 32, 16, 8]


def _pick_tiles(b, h, v_pad, budget, out_elem_bytes):
    """Pick (TB, TV, B_pad) so all double-buffered tiles + the resident output
    block + epilogue temporaries fit the VMEM budget."""
    b_pad, tb_cands = _batch_tile_candidates(b)
    for tb in tb_cands:
        for tv in _TV_CANDIDATES:
            if v_pad % tv != 0:
                continue
            wt_bytes = 2 * (h * tv * 2)                    # weight tile, 2-deep
            bias_bytes = 2 * (tv * 4)                      # bias tile, 2-deep
            x_bytes = 2 * (tb * h * 2)                     # x tile, 2-deep
            out_bytes = 2 * (tb * v_pad * out_elem_bytes)  # resident out block
            stats = 2 * (max(tb, 8) * 128 * 4)             # m / l scratches
            epilogue = 2 * (tb * tv * 4)                   # finalize temporaries
            if wt_bytes + bias_bytes + x_bytes + out_bytes + stats + epilogue <= budget:
                return tb, tv, b_pad
    # Fallback: smallest tiles even if the (conservative) estimate says tight.
    tv = 128 if v_pad % 128 == 0 else v_pad
    return tb_cands[-1], tv, b_pad


# --------------------------------------------------------------------------
# Wrapper
# --------------------------------------------------------------------------
def basic_gen_output(x, wt, b, v_out=None, *, out_dtype=jnp.float32):
    """x: [B, H]; wt: [H, V_pad] bf16, b: [1, V_pad] f32 (pre-folded).
    Returns softmax probs [B, v_out] in out_dtype (default f32)."""
    B, H = x.shape
    Hw, V_pad = wt.shape
    assert H == Hw and b.shape == (1, V_pad)
    v_out = V_pad if v_out is None else v_out

    x = jnp.asarray(x, jnp.bfloat16)

    budget, vmem_limit = _vmem_budget_and_limit()
    out_elem = jnp.dtype(out_dtype).itemsize
    TB, TV, B_pad = _pick_tiles(B, H, V_pad, budget, out_elem)

    if B_pad != B:
        x = jnp.concatenate([x, jnp.zeros((B_pad - B, H), x.dtype)], axis=0)

    grid = (B_pad // TB, V_pad // TV)

    probs = pl.pallas_call(
        _gen_output_kernel,
        out_shape=jax.ShapeDtypeStruct((B_pad, V_pad), out_dtype),
        grid_spec=pltpu.PrefetchScalarGridSpec(
            num_scalar_prefetch=0,
            grid=grid,
            in_specs=[
                pl.BlockSpec((TB, H), lambda i, j: (i, 0)),    # x (per batch tile)
                pl.BlockSpec((H, TV), lambda i, j: (0, j)),    # streamed weight tile
                pl.BlockSpec((1, TV), lambda i, j: (0, j)),    # streamed bias tile
            ],
            out_specs=pl.BlockSpec((TB, V_pad), lambda i, j: (i, 0)),
            scratch_shapes=[
                pltpu.VMEM((TB, 1), jnp.float32),              # running max
                pltpu.VMEM((TB, 1), jnp.float32),              # running sum of exp
            ],
        ),
        compiler_params=pltpu.CompilerParams(
            dimension_semantics=("parallel", "arbitrary"),
            vmem_limit_bytes=int(vmem_limit),
        ),
    )(x, wt, b)

    if B_pad != B or v_out != V_pad:
        probs = probs[:B, :v_out]
    return probs


# --------------------------------------------------------------------------
# Demo / self-check
# --------------------------------------------------------------------------
if __name__ == "__main__":
    key = jax.random.PRNGKey(0)
    B, H, V = 8, 32, 128          # batch, h_dim, out_vocab.number_of_ids()

    k_x, k_w, k_b = jax.random.split(key, 3)
    x = jax.random.normal(k_x, (B, H), dtype=jnp.float32)
    weight = jax.random.normal(k_w, (V, H), dtype=jnp.float32) * 0.1  # Linear.weight [V, H]
    bias = jax.random.normal(k_b, (V,), dtype=jnp.float32) * 0.1      # Linear.bias   [V]

    # Deterministic "rare token ids" -> build out_map exactly like __init__.
    rare_token_ids = [3, 7, 11, 60]
    rare_id = 1
    out_map = jnp.arange(V, dtype=jnp.int32)
    for r in rare_token_ids:
        out_map = out_map.at[r].set(rare_id)

    # One-time parameter folding (init time) -- not part of the per-call path.
    wt_folded, b_folded, v_true = prepare_gen_output_params(weight, bias, out_map)

    probs = basic_gen_output(x, wt_folded, b_folded, v_true)
    jax.block_until_ready(probs)

    # Pure-JAX f32 reference (kernel uses bf16 weights, so tolerance relaxed).
    ref_logits = x @ weight.T + bias
    ref_logits = ref_logits[:, out_map]
    ref = jax.nn.softmax(ref_logits, axis=-1)

    assert probs.shape == ref.shape, (probs.shape, ref.shape)
    assert jnp.allclose(probs, ref, atol=2e-3, rtol=2e-2), "mismatch vs reference"
    assert jnp.allclose(jnp.sum(probs, axis=-1), 1.0, atol=1e-3), "rows not normalized"

    print("KERNEL_OK")
</pallas_src>

<mosaic_0001>
module attributes {stable_mosaic.version = 11 : i64} {
  func.func @_gen_output_kernel(%arg0: i32, %arg1: i32, %arg2: memref<8x32xbf16, #tpu.memory_space<vmem>>, %arg3: memref<32x128xbf16, #tpu.memory_space<vmem>>, %arg4: memref<1x128xf32, #tpu.memory_space<vmem>>, %arg5: memref<8x128xf32, #tpu.memory_space<vmem>>, %arg6: memref<8x1xf32, #tpu.memory_space<vmem>>, %arg7: memref<8x1xf32, #tpu.memory_space<vmem>>) attributes {dimension_semantics = [#tpu.dimension_semantics<parallel>, #tpu.dimension_semantics<arbitrary>], iteration_bounds = array<i64: 1, 1>, scalar_prefetch = 0 : i64, scratch_operands = 2 : i64, tpu.core_type = #tpu.core_type<tc>, window_params = [{transform_indices = @transform_0, window_bounds = array<i64: 8, 32>}, {transform_indices = @transform_1, window_bounds = array<i64: 32, 128>}, {transform_indices = @transform_2, window_bounds = array<i64: 1, 128>}, {transform_indices = @transform_3, window_bounds = array<i64: 8, 128>}]} {
    %c0_i32 = arith.constant 0 : i32
    %0 = arith.cmpi eq, %arg1, %c0_i32 : i32
    %1 = arith.extui %0 : i1 to i32
    %c0_i32_0 = arith.constant 0 : i32
    %2 = arith.cmpi ne, %1, %c0_i32_0 : i32
    scf.if %2 {
      %cst_19 = arith.constant 0xFF800000 : f32
      %32 = vector.broadcast %cst_19 : f32 to vector<8x1xf32>
      %c0_20 = arith.constant 0 : index
      %c0_21 = arith.constant 0 : index
      %33 = vector.load %arg6[%c0_20, %c0_21] : memref<8x1xf32, #tpu.memory_space<vmem>>, vector<8x1xf32>
      tpu.vector_store %arg6[%c0_20, %c0_21], %32 {strides = array<i32>} : memref<8x1xf32, #tpu.memory_space<vmem>>, vector<8x1xf32>,
      %cst_22 = arith.constant 0.000000e+00 : f32
      %34 = vector.broadcast %cst_22 : f32 to vector<8x1xf32>
      %c0_23 = arith.constant 0 : index
      %c0_24 = arith.constant 0 : index
      %35 = vector.load %arg7[%c0_23, %c0_24] : memref<8x1xf32, #tpu.memory_space<vmem>>, vector<8x1xf32>
      tpu.vector_store %arg7[%c0_23, %c0_24], %34 {strides = array<i32>} : memref<8x1xf32, #tpu.memory_space<vmem>>, vector<8x1xf32>,
    } else {
    }
    %c0 = arith.constant 0 : index
    %c0_1 = arith.constant 0 : index
    %3 = vector.load %arg2[%c0, %c0_1] : memref<8x32xbf16, #tpu.memory_space<vmem>>, vector<8x32xbf16>
    %c0_2 = arith.constant 0 : index
    %c0_3 = arith.constant 0 : index
    %4 = vector.load %arg3[%c0_2, %c0_3] : memref<32x128xbf16, #tpu.memory_space<vmem>>, vector<32x128xbf16>
    %cst = arith.constant dense<0.000000e+00> : vector<8x128xf32>
    %5 = tpu.matmul %3, %4, %cst {dimension_numbers = #tpu.dot_dimension_numbers<[1], [0], [0], [1], [0, 0, 1, 1], [], []>} : vector<8x32xbf16>, vector<32x128xbf16>, vector<8x128xf32> -> vector<8x128xf32>
    %c0_4 = arith.constant 0 : index
    %c0_5 = arith.constant 0 : index
    %6 = vector.load %arg4[%c0_4, %c0_5] : memref<1x128xf32, #tpu.memory_space<vmem>>, vector<1x128xf32>
    %7 = vector.broadcast %6 : vector<1x128xf32> to vector<8x128xf32>
    %8 = arith.addf %5, %7 : vector<8x128xf32>
    %c128_i32 = arith.constant 128 : i32
    %9 = arith.muli %arg1, %c128_i32 : i32
    %10 = tpu.assume_multiple %9, 128 : i32
    %c0_6 = arith.constant 0 : index
    %11 = arith.index_cast %10 : i32 to index
    %12 = vector.load %arg5[%c0_6, %11] : memref<8x128xf32, #tpu.memory_space<vmem>>, vector<8x128xf32>
    tpu.vector_store %arg5[%c0_6, %11], %8 {strides = array<i32>} : memref<8x128xf32, #tpu.memory_space<vmem>>, vector<8x128xf32>,
    %c0_7 = arith.constant 0 : index
    %c0_8 = arith.constant 0 : index
    %13 = vector.load %arg6[%c0_7, %c0_8] : memref<8x1xf32, #tpu.memory_space<vmem>>, vector<8x1xf32>
    %cst_9 = arith.constant dense<0xFF800000> : vector<8xf32>
    %14 = vector.multi_reduction <maximumf>, %8, %cst_9 [1] : vector<8x128xf32> to vector<8xf32>
    %15 = vector.shape_cast %14 : vector<8xf32> to vector<8x1xf32>
    %16 = arith.maximumf %13, %15 : vector<8x1xf32>
    %c0_10 = arith.constant 0 : index
    %c0_11 = arith.constant 0 : index
    %17 = vector.load %arg7[%c0_10, %c0_11] : memref<8x1xf32, #tpu.memory_space<vmem>>, vector<8x1xf32>
    %18 = arith.subf %13, %16 : vector<8x1xf32>
    %19 = math.exp %18 : vector<8x1xf32>
    %20 = arith.mulf %17, %19 : vector<8x1xf32>
    %21 = vector.broadcast %16 : vector<8x1xf32> to vector<8x128xf32>
    %22 = arith.subf %8, %21 : vector<8x128xf32>
    %23 = math.exp %22 : vector<8x128xf32>
    %cst_12 = arith.constant dense<0.000000e+00> : vector<8xf32>
    %24 = vector.multi_reduction <add>, %23, %cst_12 [1] : vector<8x128xf32> to vector<8xf32>
    %25 = vector.shape_cast %24 : vector<8xf32> to vector<8x1xf32>
    %26 = arith.addf %20, %25 : vector<8x1xf32>
    %c0_13 = arith.constant 0 : index
    %c0_14 = arith.constant 0 : index
    %27 = vector.load %arg7[%c0_13, %c0_14] : memref<8x1xf32, #tpu.memory_space<vmem>>, vector<8x1xf32>
    tpu.vector_store %arg7[%c0_13, %c0_14], %26 {strides = array<i32>} : memref<8x1xf32, #tpu.memory_space<vmem>>, vector<8x1xf32>,
    %c0_15 = arith.constant 0 : index
    %c0_16 = arith.constant 0 : index
    %28 = vector.load %arg6[%c0_15, %c0_16] : memref<8x1xf32, #tpu.memory_space<vmem>>, vector<8x1xf32>
    tpu.vector_store %arg6[%c0_15, %c0_16], %16 {strides = array<i32>} : memref<8x1xf32, #tpu.memory_space<vmem>>, vector<8x1xf32>,
    %c0_i32_17 = arith.constant 0 : i32
    %29 = arith.cmpi eq, %arg1, %c0_i32_17 : i32
    %30 = arith.extui %29 : i1 to i32
    %c0_i32_18 = arith.constant 0 : i32
    %31 = arith.cmpi ne, %30, %c0_i32_18 : i32
    scf.if %31 {
      %c0_19 = arith.constant 0 : index
      %c0_20 = arith.constant 0 : index
      %32 = vector.load %arg6[%c0_19, %c0_20] : memref<8x1xf32, #tpu.memory_space<vmem>>, vector<8x1xf32>
      %c0_21 = arith.constant 0 : index
      %c0_22 = arith.constant 0 : index
      %33 = vector.load %arg7[%c0_21, %c0_22] : memref<8x1xf32, #tpu.memory_space<vmem>>, vector<8x1xf32>
      %cst_23 = arith.constant 1.000000e+00 : f32
      %34 = vector.broadcast %cst_23 : f32 to vector<8x1xf32>
      %35 = arith.divf %34, %33 : vector<8x1xf32>
      %c0_i32_24 = arith.constant 0 : i32
      %c1_i32 = arith.constant 1 : i32
      %36 = arith.muli %c0_i32_24, %c1_i32 : i32
      %c0_i32_25 = arith.constant 0 : i32
      %37 = arith.addi %c0_i32_25, %36 : i32
      %c128_i32_26 = arith.constant 128 : i32
      %38 = arith.muli %37, %c128_i32_26 : i32
      %39 = tpu.assume_multiple %38, 128 : i32
      %c0_27 = arith.constant 0 : index
      %40 = arith.index_cast %39 : i32 to index
      %41 = vector.load %arg5[%c0_27, %40] : memref<8x128xf32, #tpu.memory_space<vmem>>, vector<8x128xf32>
      %42 = vector.broadcast %32 : vector<8x1xf32> to vector<8x128xf32>
      %43 = arith.subf %41, %42 : vector<8x128xf32>
      %44 = math.exp %43 : vector<8x128xf32>
      %45 = vector.broadcast %35 : vector<8x1xf32> to vector<8x128xf32>
      %46 = arith.mulf %44, %45 : vector<8x128xf32>
      %c0_28 = arith.constant 0 : index
      %47 = arith.index_cast %39 : i32 to index
      %48 = vector.load %arg5[%c0_28, %47] : memref<8x128xf32, #tpu.memory_space<vmem>>, vector<8x128xf32>
      tpu.vector_store %arg5[%c0_28, %47], %46 {strides = array<i32>} : memref<8x128xf32, #tpu.memory_space<vmem>>, vector<8x128xf32>,
      %c1_i32_29 = arith.constant 1 : i32
    } else {
    }
    return
  }
  func.func @transform_0(%arg0: i32, %arg1: i32) -> (i32, i32) {
    %c0_i32 = arith.constant 0 : i32
    %c0_i32_0 = arith.constant 0 : i32
    return %arg0, %c0_i32 : i32, i32
  }
  func.func @transform_1(%arg0: i32, %arg1: i32) -> (i32, i32) {
    %c0_i32 = arith.constant 0 : i32
    %c0_i32_0 = arith.constant 0 : i32
    return %c0_i32, %arg1 : i32, i32
  }
  func.func @transform_2(%arg0: i32, %arg1: i32) -> (i32, i32) {
    %c0_i32 = arith.constant 0 : i32
    %c0_i32_0 = arith.constant 0 : i32
    return %c0_i32, %arg1 : i32, i32
  }
  func.func @transform_3(%arg0: i32, %arg1: i32) -> (i32, i32) {
    %c0_i32 = arith.constant 0 : i32
    %c0_i32_0 = arith.constant 0 : i32
    return %arg0, %c0_i32 : i32, i32
  }
}

</mosaic_0001>

<llo_original>
// kernel: tpu_custom_call.1
$region0: #{tpu_custom_call.1}
  #allocation0 [shape = 'u32[]', space=smem, size = 0x4, offset = 0x4, fixed_abs, tag = 'smem constant byte address 0x4 - core index']
  #allocation1 [shape = 'u32[144,128]{1,0:T(1,128)}', space=vmem, size = 0x12000, scoped, tag = 'internal scratch']
  #allocation2 [shape = 'f32[8,1]{1,0:T(8,128)}', space=vmem, size = 0x1000, scoped, tag = 'scratch operand']
  #allocation3 [shape = 'f32[8,1]{1,0:T(8,128)}', space=vmem, size = 0x1000, scoped, tag = 'scratch operand']
  %s0 = inlined_call_operand.hbm [shape: bf16[8,32], index: 0, kind: input, shape index: {}]
  %s1 = inlined_call_operand.hbm [shape: bf16[32,128], index: 1, kind: input, shape index: {}]
  %s2 = inlined_call_operand.vmem [shape: f32[1,128], index: 2, kind: input, shape index: {}]
  %s3 = inlined_call_operand.hbm [shape: f32[8,128], index: 3, kind: output, shape index: {}]
  %s4 = sld [smem:[#allocation0]]
  $region38: #{tpu_custom_call.1} parent=0
    _
  %s6 = ssub.s32 1, %s4
  %s7 = scalar_select 0, %s6, %s4
  $region1: #{tpu_custom_call.1} parent=0
    #allocation4 [shape = 'u8[2048]{0}', space=vmem, size = 0x800, scoped, tag = 'input window, operand 0, single buffered']
    #allocation5 [shape = 's32[1]{0}', space=sflag, size = 0x4, scoped, tag = 'scoped memory for tpu_custom_call.1']
    #allocation6 [shape = 's32[1]{0}', space=sflag, size = 0x4, scoped, tag = 'scoped memory for tpu_custom_call.1']
    #allocation7 [shape = 'u8[8192]{0}', space=vmem, size = 0x2000, scoped, tag = 'input window, operand 1, single buffered']
    #allocation8 [shape = 's32[1]{0}', space=sflag, size = 0x4, scoped, tag = 'scoped memory for tpu_custom_call.1']
    #allocation9 [shape = 'u8[4096]{0}', space=vmem, size = 0x1000, scoped, tag = 'output window, operand 0, single buffered']
    %8 = vsyncpa [#allocation5], 0
    %9 = vsyncpa [#allocation8], 0
    %10 = vsyncpa [#allocation6], 0
    // Predicated region
    $region2: #{tpu_custom_call.1} parent=1 // pred_check
      _
    $region3: #{tpu_custom_call.1} parent=1 // pred_check_branch
      %12 = sbr.rel (0) target = $region5
    $region4: #{tpu_custom_call.1} parent=1 // pred_region
      %s14 = ssub.s32 64, 64
      %15 = vsyncadd [#allocation5], %s14
      %s17 = sshll.u32 [#allocation4], 4
      %s18 = int_to_ptr.vmem [resolvable:$true] %s17
      %20 = dma.hbm_to_vmem [thread:$0]  %s0, 64, %s18, [#allocation5]
    $region5: #{tpu_custom_call.1} parent=1 // pred_fallthru
      _
    // Predicated region
    $region6: #{tpu_custom_call.1} parent=1 // pred_check
      _
    $region7: #{tpu_custom_call.1} parent=1 // pred_check_branch
      %22 = sbr.rel (0) target = $region9
    $region8: #{tpu_custom_call.1} parent=1 // pred_region
      %s24 = ssub.s32 256, 256
      %25 = vsyncadd [#allocation8], %s24
      %s26 = sshll.u32 [#allocation7], 4
      %s27 = int_to_ptr.vmem [resolvable:$true] %s26
      %32 = dma.hbm_to_vmem [thread:$0]  %s1, 256, %s27, [#allocation8], 64, 64, 4
    $region9: #{tpu_custom_call.1} parent=1 // pred_fallthru
      _
    // Predicated region
    $region10: #{tpu_custom_call.1} parent=1 // pred_check
      _
    $region11: #{tpu_custom_call.1} parent=1 // pred_check_branch
      %34 = sbr.rel (0) target = $region13
    $region12: #{tpu_custom_call.1} parent=1 // pred_region
      _
    $region13: #{tpu_custom_call.1} parent=1 // pred_fallthru
      _
    // Predicated region
    $region14: #{tpu_custom_call.1} parent=1 // pred_check
      _
    $region15: #{tpu_custom_call.1} parent=1 // pred_check_branch
      %36 = sbr.rel (0) target = $region17
    $region16: #{tpu_custom_call.1} parent=1 // pred_region
      %37 = dma.done [#allocation5], 64
    $region17: #{tpu_custom_call.1} parent=1 // pred_fallthru
      _
    // Predicated region
    $region18: #{tpu_custom_call.1} parent=1 // pred_check
      _
    $region19: #{tpu_custom_call.1} parent=1 // pred_check_branch
      %39 = sbr.rel (0) target = $region21
    $region20: #{tpu_custom_call.1} parent=1 // pred_region
      %40 = dma.done [#allocation8], 256
    $region21: #{tpu_custom_call.1} parent=1 // pred_fallthru
      _
    %p42 = scmp.eq.s32.totalorder 0, 0
    // Predicated region
    $region22: #{tpu_custom_call.1} parent=1 // pred_check
      %p43 = pneg %p42
    $region23: #{tpu_custom_call.1} parent=1 // pred_check_branch
      %45 = sbr.rel (%p43) target = $region25
    $region24: #{tpu_custom_call.1} parent=1 // pred_region
      %vm46 = vcmask 7168
      %47 = vst.msk [vmem:[#allocation2] sm:$0xff] %vm46, -inf
      %48 = vst.msk [vmem:[#allocation3] sm:$0xff] %vm46, 0.0
    $region25: #{tpu_custom_call.1} parent=1 // pred_fallthru
      _
    %v49 = vld [vmem:[#allocation4] sm:$0xf]
    %v50 = vld [vmem:[#allocation7] sm:$0xf]
    %v51 = vld [vmem:[#allocation7 + $0x4] sm:$0xf]
    %v52 = vld [vmem:[#allocation7 + $0x8] sm:$0xf]
    %v53 = vld [vmem:[#allocation7 + $0xc] sm:$0xf]
    %v54 = vld [vmem:[%s2] sm:$0x1]
    %v56 = vlaneseq
    %v57 = vshrl.u32 %v56, 7
    %v58 = vsub.s32 0, %v57
    %v59 = vrot.slane %v54, %v58
    %v65 = vunpack.c.l.b16 %v50
    %v66 = vunpack.c.l.b16 %v51
    %v67 = vunpack.c.l.b16 %v52
    %v68 = vunpack.c.l.b16 %v53
    %v69 = vpack.c.b16 %v66, %v65
    %v70 = vpack.c.b16 %v68, %v67
    %vm73 = vcmask 261120
    %v75 = vsel %vm73, %v49, 0
    %77 = vmatprep.subr.bf16.mxu0 0
    %78 = vmatpush1.bf16.msra.mxu0 %v69
    %79 = vmatprep.subr.bf16.mxu0 0
    %80 = vmatpush1.bf16.msra.mxu0 %v70
    %81 = vmatprep.subr.bf16.mxu0 0
    %82 = vmatpush1.bf16.msra.mxu0 0
    %83 = vmatprep.subr.bf16.mxu0 0
    %84 = vmatpush1.bf16.msra.mxu0 0
    %85 = vmatprep.subr.bf16.mxu0 0
    %86 = vmatpush1.bf16.msra.mxu0 0
    %87 = vmatprep.subr.bf16.mxu0 0
    %88 = vmatpush1.bf16.msra.mxu0 0
    %89 = vmatprep.subr.bf16.mxu0 0
    %90 = vmatpush1.bf16.msra.mxu0 0
    %91 = vmatprep.subr.bf16.mxu0 0
    %92 = vmatpush1.bf16.msra.mxu0 0
    %93 = vmatprep.subr.bf16.mxu0 0
    %94 = vmatpush1.bf16.msra.mxu0 0
    %95 = vmatprep.subr.bf16.mxu0 0
    %96 = vmatpush1.bf16.msra.mxu0 0
    %97 = vmatprep.subr.bf16.mxu0 0
    %98 = vmatpush1.bf16.msra.mxu0 0
    %99 = vmatprep.subr.bf16.mxu0 0
    %100 = vmatpush1.bf16.msra.mxu0 0
    %101 = vmatprep.subr.bf16.mxu0 0
    %102 = vmatpush1.bf16.msra.mxu0 0
    %103 = vmatprep.subr.bf16.mxu0 0
    %104 = vmatpush1.bf16.msra.mxu0 0
    %105 = vmatprep.subr.bf16.mxu0 0
    %106 = vmatpush1.bf16.msra.mxu0 0
    %107 = vmatprep.subr.bf16.mxu0 0
    %108 = vmatpush1.bf16.msra.mxu0 0
    %109 = vmatprep.mubr.bf16.mxu0 0
    %110 = vmatmul.mubr.bf16.gmra.mrb[0].mxu0 %v75
    %v111 = vpop.f32.mrb[0].mxu0
    %v112 = vadd.f32 %v59, %v111
    %v113 = vpop.f32.mrb[0].mxu0
    %v114 = vpop.f32.mrb[0].mxu0
    %v115 = vpop.f32.mrb[0].mxu0
    %116 = vdwg.mxu0
    %s117 = smul.u32 0, 128
    %s118 = sshra.s32 %s117, 7
    %s119 = sand.u32 %s117, 127
    %s120 = scalar_lea.vmem [#allocation9], %s118
    %121 = vst [vmem:[%s120] sm:$0xff] %v112
    %v122 = vld [vmem:[#allocation2] sm:$0xff]
    %123 = vmax.xlane.f32.xlu0 %v112
    %v124 = vpop.xlane.xlu0 %123
    %v125 = vmax.f32 %v122, %v124
    %v126 = vld [vmem:[#allocation3] sm:$0xff]
    %v127 = vsub.f32 %v122, %v125
    %v128 = vmul.f32 %v127, 1.442695
    %v129 = vpow.pop %v128
    %v130 = vmul.f32 %v126, %v129
    %132 = vset.pattern.permute.xlu0 0
    %133 = vperm.xlu0 %132, %v125
    %v134 = vpop.permute.xlu0 %133
    %v136 = vsub.f32 %v112, %v134
    %v137 = vmul.f32 %v136, 1.442695
    %v138 = vpow.pop %v137
    %139 = vadd.xlane.f32.xlu0 %v138
    %v140 = vpop.xlane.xlu0 %139
    %v141 = vadd.f32 %v130, %v140
    %vm142 = vcmask 7168
    %143 = vst.msk [vmem:[#allocation3] sm:$0xff] %vm142, %v141
    %144 = vst.msk [vmem:[#allocation2] sm:$0xff] %vm142, %v125
    // Predicated region
    $region26: #{tpu_custom_call.1} parent=1 // pred_check
      %p145 = pneg %p42
    $region27: #{tpu_custom_call.1} parent=1 // pred_check_branch
      %147 = sbr.rel (%p145) target = $region29
    $region28: #{tpu_custom_call.1} parent=1 // pred_region
      %v148 = vld [vmem:[#allocation2] sm:$0xff]
      %v149 = vld [vmem:[#allocation3] sm:$0xff]
      %v150 = vrcp.pop %v149
      %v151 = vmul.f32 1.0, %v150
      %v152 = vld [vmem:[#allocation9] sm:$0xff]
      %154 = vset.pattern.permute.xlu0 0
      %155 = vperm.xlu0 %154, %v148
      %v156 = vpop.permute.xlu0 %155
      %v158 = vsub.f32 %v152, %v156
      %v159 = vmul.f32 %v158, 1.442695
      %v160 = vpow.pop %v159
      %162 = vset.pattern.permute.xlu0 0
      %163 = vperm.xlu0 %162, %v151
      %v164 = vpop.permute.xlu0 %163
      %v166 = vmul.f32 %v160, %v164
      %167 = vst [vmem:[#allocation9] sm:$0xff] %v166
    $region29: #{tpu_custom_call.1} parent=1 // pred_fallthru
      _
    // Predicated region
    $region30: #{tpu_custom_call.1} parent=1 // pred_check
      _
    $region31: #{tpu_custom_call.1} parent=1 // pred_check_branch
      %169 = sbr.rel (0) target = $region33
    $region32: #{tpu_custom_call.1} parent=1 // pred_region
      %s171 = ssub.s32 128, 128
      %172 = vsyncadd [#allocation6], %s171
      %s174 = sshll.u32 [#allocation9], 4
      %s175 = int_to_ptr.vmem [resolvable:$true] %s174
      %177 = dma.vmem_to_hbm [thread:$0]  %s175, 128, %s3, [#allocation6]
    $region33: #{tpu_custom_call.1} parent=1 // pred_fallthru
      _
    // Predicated region
    $region34: #{tpu_custom_call.1} parent=1 // pred_check
      _
    $region35: #{tpu_custom_call.1} parent=1 // pred_check_branch
      %179 = sbr.rel (0) target = $region37
    $region36: #{tpu_custom_call.1} parent=1 // pred_region
      %180 = dma.done [#allocation6], 128
    $region37: #{tpu_custom_call.1} parent=1 // pred_fallthru
      _
    %181 = vsyncpa [#allocation5], 1
    %182 = vsyncpa [#allocation8], 1
    %183 = vsyncpa [#allocation6], 1

</llo_original>
